<compile_context>
chip_gen: v5e
topology: v5e:2x2
jax: 0.10.0
libtpu: 0.0.40
codegen_flags: <defaults>
</compile_context>

<pallas_src>
import functools

import jax
import jax.numpy as jnp
import numpy as np
from jax.experimental import pallas as pl
from jax.experimental.pallas import tpu as pltpu

EPS = 1e-8
_BLOCK_TARGET_BYTES = 4 * 1024 * 1024    # ~4 MiB streamed block (all K inputs)
_VMEM_LIMIT_BYTES = 32 * 1024 * 1024     # safe on v5e/v6e/v7x


def _round_up(x: int, m: int) -> int:
    return ((x + m - 1) // m) * m


# ----------------------------------------------------------------------------
# Pallas kernel: streamed raw-Gram accumulation
# ----------------------------------------------------------------------------
def _gram_kernel(*refs, n_total_chunks: int, npc: int, d_chunk: int,
                 d_real: int, has_partial: bool):
    g_refs, out_ref = refs[:-1], refs[-1]      # K inputs (r, dc); out (Kp, Kp)
    p = pl.program_id(0)                       # megacore split index
    c = pl.program_id(1)                       # chunk index within the split

    @pl.when(c == 0)
    def _init():
        out_ref[...] = jnp.zeros(out_ref.shape, jnp.float32)

    # Assemble the (Kp, dc) tile from the K separately-streamed learner blocks.
    # VMEM->VMEM copy work only; hides under the HBM DMA of the next chunk.
    g = jnp.concatenate([ref[...] for ref in g_refs], axis=0)

    def _accum(gg):
        # Raw Gram accumulation on the MXU.  Contracting the rhs on its last
        # dim implies an in-VMEM transpose (XLU); accepted -- sublane packing
        # already halved the transpose tiles per HBM byte and the XLU slot is
        # otherwise idle on this HBM-bound stream.
        out_ref[...] += jax.lax.dot_general(
            gg, gg, dimension_numbers=(((1,), (1,)), ((), ())),
            preferred_element_type=jnp.float32)

    if has_partial:
        gc = p * npc + c                        # global chunk index
        last = n_total_chunks - 1

        @pl.when(gc != last)
        def _full():
            _accum(g)

        @pl.when(gc == last)
        def _edge():
            # Pallas does not zero-fill edge blocks: mask lanes past the true
            # extent.  Only this (single) edge chunk pays the iota/select cost.
            col = jax.lax.broadcasted_iota(jnp.int32, g.shape, 1) + gc * d_chunk
            _accum(jnp.where(col < d_real, g, 0.0))
    else:
        _accum(g)


# ----------------------------------------------------------------------------
# Wrapper: per-layer orthogonality loss
# ----------------------------------------------------------------------------
def orth_grad_layer_loss(learner_grads, k, d_chunk=None):
    """learner_grads: list of K per-learner gradient arrays (same element count
    D each).  Returns the scalar orthogonality loss for the layer."""
    assert len(learner_grads) == k
    assert k >= 2, "OrthGradLoss requires K >= 2 (divides by K - 1)."
    d = int(np.prod(learner_grads[0].shape))
    for g in learner_grads:
        assert int(np.prod(g.shape)) == d, "learner grads must have equal size"
    assert d < 2 ** 31, "int32 lane offsets in the kernel"

    # Sublane packing: fold each learner row into r = 8 // K sub-rows so the
    # streamed f32 tile fills all 8 sublanes (e.g. K=4 -> (8, D/2) instead of a
    # half-empty (4, D)).  Falls back to r = 1 when it does not divide.
    if k <= 8 and 8 % k == 0 and d % (8 // k) == 0:
        r = 8 // k
    else:
        r = 1
    kp = k * r
    ds = d // r                                 # lanes per packed sub-row

    if d_chunk is None:
        d_chunk = _round_up(max(128, _BLOCK_TARGET_BYTES // (kp * 4)), 128)
    else:
        d_chunk = _round_up(max(1, d_chunk), 128)
    if d_chunk >= ds:
        d_chunk = ds                            # single full-extent block
        n_chunks = 1
        has_partial = False
    else:
        n_chunks = pl.cdiv(ds, d_chunk)
        has_partial = (ds % d_chunk) != 0

    # v7x megacore: split the chunk stream across the two TensorCores via a
    # leading 'parallel' grid axis (each emits a partial Gram).  Harmless
    # (sequential) on single-TC v5e/v6e.
    n_split = 2 if (n_chunks >= 4 and n_chunks % 2 == 0) else 1
    npc = n_chunks // n_split

    # Metadata-only reshapes of contiguous buffers: no HBM copy (unlike the
    # jnp.stack([...]) of the naive port).
    gs = [g.reshape(r, ds).astype(jnp.float32) for g in learner_grads]

    kernel = functools.partial(
        _gram_kernel, n_total_chunks=n_chunks, npc=npc,
        d_chunk=d_chunk, d_real=ds, has_partial=has_partial)

    in_spec = pl.BlockSpec((r, d_chunk), lambda p, c: (0, p * npc + c))
    gram_parts = pl.pallas_call(
        kernel,
        out_shape=jax.ShapeDtypeStruct((n_split, kp, kp), jnp.float32),
        grid_spec=pltpu.PrefetchScalarGridSpec(
            num_scalar_prefetch=0,
            grid=(n_split, npc),
            in_specs=[in_spec] * k,
            out_specs=pl.BlockSpec((None, kp, kp), lambda p, c: (p, 0, 0))),
        compiler_params=pltpu.CompilerParams(
            dimension_semantics=("parallel", "arbitrary"),
            vmem_limit_bytes=_VMEM_LIMIT_BYTES),
        cost_estimate=pl.CostEstimate(
            flops=int(2 * kp * kp * ds),
            transcendentals=0,
            bytes_accessed=int(k * d * 4 + n_split * kp * kp * 4)),
    )(*gs)

    # Finalize (tiny K x K math) in plain JAX: combine core partials, undo the
    # sublane packing, normalise by row norms (diag == ||g_i||^2), zero the
    # diagonal, reduce.  Mathematically identical to normalising rows first.
    gram_p = jnp.sum(gram_parts, axis=0)                      # (Kp, Kp)
    if r > 1:
        gram = jnp.einsum('iaja->ij', gram_p.reshape(k, r, k, r))
    else:
        gram = gram_p
    inv = 1.0 / (EPS + jnp.sqrt(jnp.diagonal(gram)))
    gram_n = gram * inv[:, None] * inv[None, :]
    off = gram_n * (1.0 - jnp.eye(k, dtype=jnp.float32))
    return jnp.sum(off * off) / (2.0 * k * (k - 1))


# ----------------------------------------------------------------------------
# Glue: synthetic "layers of learners" + seg_loss + autograd (jax.grad)
# ----------------------------------------------------------------------------
def _conv_nchw(x, w):
    # PyTorch-style NCHW conv, OIHW weights, stride 1, SAME padding.
    return jax.lax.conv_general_dilated(
        x, w, window_strides=(1, 1), padding="SAME",
        dimension_numbers=("NCHW", "OIHW", "NCHW"))


def seg_loss_fn(params, x):
    """params = (layer0_weights, layer1_weights); each a list of K OIHW kernels."""
    w_layer0, w_layer1 = params
    h = sum(_conv_nchw(x, w) for w in w_layer0)
    h = jax.nn.relu(h)
    h = sum(_conv_nchw(h, w) for w in w_layer1)
    return jnp.mean(h * h)


def orth_grad_loss(params, x, k):
    """Equivalent of OrthGradLoss.forward(seg_loss, layers)."""
    grads = jax.grad(seg_loss_fn)(params, x)   # same pytree as params
    total = jnp.float32(0.0)
    for layer_grads in grads:                  # one list of K grad tensors per layer
        total = total + orth_grad_layer_loss(list(layer_grads), k)
    return total


# Pure-JAX reference of forward_layer, for correctness checks.
def _ref_layer_loss(g, k):
    g = g.astype(jnp.float32)
    norm = jnp.sqrt(jnp.sum(jnp.square(g), axis=-1))
    gn = g / (EPS + norm[:, None])
    gram = gn @ gn.T
    mask = jnp.ones((k, k), jnp.float32) - jnp.eye(k, dtype=jnp.float32)
    return jnp.sum(jnp.square(gram * mask)) / 2.0 / k / (k - 1)


def _ref_loss(params, x, k):
    grads = jax.grad(seg_loss_fn)(params, x)
    total = jnp.float32(0.0)
    for layer_grads in grads:
        g = jnp.stack([gw.reshape(-1) for gw in layer_grads], axis=0)
        total = total + _ref_layer_loss(g, k)
    return total


# ----------------------------------------------------------------------------
if __name__ == "__main__":
    K = 4                      # learners per layer
    N, C, H, W = 2, 4, 16, 16  # NCHW input
    C_MID = 8

    key = jax.random.PRNGKey(0)
    k_x, k_b, k_c, *k_ws = jax.random.split(key, 3 + 2 * K)

    x = jax.random.normal(k_x, (N, C, H, W), jnp.float32)

    # Layer 0: K learners, Conv2d(C -> C_MID, 3x3)   -> weight (8, 4, 3, 3)
    # Layer 1: K learners, Conv2d(C_MID -> C_MID, 3) -> weight (8, 8, 3, 3)
    w_layer0 = [0.1 * jax.random.normal(k_ws[i], (C_MID, C, 3, 3), jnp.float32)
                for i in range(K)]
    w_layer1 = [0.1 * jax.random.normal(k_ws[K + i], (C_MID, C_MID, 3, 3),
                                        jnp.float32)
                for i in range(K)]
    params = (w_layer0, w_layer1)

    # 1) Full module semantics: autograd + per-layer Pallas kernel (single
    #    chunk per layer, sublane-packed r=2).
    loss = jax.block_until_ready(orth_grad_loss(params, x, K))
    ref = jax.block_until_ready(_ref_loss(params, x, K))
    np.testing.assert_allclose(np.asarray(loss), np.asarray(ref),
                               rtol=1e-4, atol=1e-6)

    # 2) Multi-chunk accumulation + partial-lane mask + sublane packing (K=4 ->
    #    r=2) + 2-way megacore split (4 even chunks).
    gb = jax.random.normal(k_b, (4, 1800), jnp.float32)
    got = jax.block_until_ready(
        orth_grad_layer_loss([gb[i] for i in range(4)], 4, d_chunk=256))
    want = jax.block_until_ready(_ref_layer_loss(gb, 4))
    np.testing.assert_allclose(np.asarray(got), np.asarray(want),
                               rtol=1e-4, atol=1e-6)

    # 3) Unpacked path (K=8 -> r=1), odd chunk count (no split), partial mask.
    gc_ = jax.random.normal(k_c, (8, 700), jnp.float32)
    got = jax.block_until_ready(
        orth_grad_layer_loss([gc_[i] for i in range(8)], 8, d_chunk=256))
    want = jax.block_until_ready(_ref_layer_loss(gc_, 8))
    np.testing.assert_allclose(np.asarray(got), np.asarray(want),
                               rtol=1e-4, atol=1e-6)

    print("KERNEL_OK")
</pallas_src>

<mosaic_0001>
module attributes {stable_mosaic.version = 11 : i64} {
  func.func @_gram_kernel(%arg0: i32, %arg1: i32, %arg2: memref<2x144xf32, #tpu.memory_space<vmem>>, %arg3: memref<2x144xf32, #tpu.memory_space<vmem>>, %arg4: memref<2x144xf32, #tpu.memory_space<vmem>>, %arg5: memref<2x144xf32, #tpu.memory_space<vmem>>, %arg6: memref<1x8x8xf32, #tpu.memory_space<vmem>>) attributes {dimension_semantics = [#tpu.dimension_semantics<parallel>, #tpu.dimension_semantics<arbitrary>], iteration_bounds = array<i64: 1, 1>, scalar_prefetch = 0 : i64, scratch_operands = 0 : i64, tpu.core_type = #tpu.core_type<tc>, window_params = [{transform_indices = @transform_0, window_bounds = array<i64: 2, 144>}, {transform_indices = @transform_1, window_bounds = array<i64: 2, 144>}, {transform_indices = @transform_2, window_bounds = array<i64: 2, 144>}, {transform_indices = @transform_3, window_bounds = array<i64: 2, 144>}, {transform_indices = @transform_4, window_bounds = array<i64: 1, 8, 8>}]} {
    %c0_i32 = arith.constant 0 : i32
    %0 = arith.cmpi eq, %arg1, %c0_i32 : i32
    %1 = arith.extui %0 : i1 to i32
    %c0_i32_0 = arith.constant 0 : i32
    %2 = arith.cmpi ne, %1, %c0_i32_0 : i32
    scf.if %2 {
      %cst_14 = arith.constant 0.000000e+00 : f32
      %15 = vector.broadcast %cst_14 : f32 to vector<8x8xf32>
      %c0_15 = arith.constant 0 : index
      %c0_16 = arith.constant 0 : index
      %c0_17 = arith.constant 0 : index
      %16 = vector.load %arg6[%c0_15, %c0_16, %c0_17] : memref<1x8x8xf32, #tpu.memory_space<vmem>>, vector<1x8x8xf32>
      %17 = vector.shape_cast %16 : vector<1x8x8xf32> to vector<8x8xf32>
      %18 = vector.shape_cast %15 : vector<8x8xf32> to vector<1x8x8xf32>
      tpu.vector_store %arg6[%c0_15, %c0_16, %c0_17], %18 {strides = array<i32>} : memref<1x8x8xf32, #tpu.memory_space<vmem>>, vector<1x8x8xf32>,
    } else {
    }
    %c0 = arith.constant 0 : index
    %c0_1 = arith.constant 0 : index
    %3 = vector.load %arg2[%c0, %c0_1] : memref<2x144xf32, #tpu.memory_space<vmem>>, vector<2x144xf32>
    %c0_2 = arith.constant 0 : index
    %c0_3 = arith.constant 0 : index
    %4 = vector.load %arg3[%c0_2, %c0_3] : memref<2x144xf32, #tpu.memory_space<vmem>>, vector<2x144xf32>
    %c0_4 = arith.constant 0 : index
    %c0_5 = arith.constant 0 : index
    %5 = vector.load %arg4[%c0_4, %c0_5] : memref<2x144xf32, #tpu.memory_space<vmem>>, vector<2x144xf32>
    %c0_6 = arith.constant 0 : index
    %c0_7 = arith.constant 0 : index
    %6 = vector.load %arg5[%c0_6, %c0_7] : memref<2x144xf32, #tpu.memory_space<vmem>>, vector<2x144xf32>
    %7 = tpu.concatenate %3, %4, %5, %6 in 0 : vector<2x144xf32>, vector<2x144xf32>, vector<2x144xf32>, vector<2x144xf32> -> vector<8x144xf32>
    %c0_8 = arith.constant 0 : index
    %c0_9 = arith.constant 0 : index
    %c0_10 = arith.constant 0 : index
    %8 = vector.load %arg6[%c0_8, %c0_9, %c0_10] : memref<1x8x8xf32, #tpu.memory_space<vmem>>, vector<1x8x8xf32>
    %9 = vector.shape_cast %8 : vector<1x8x8xf32> to vector<8x8xf32>
    %cst = arith.constant dense<0.000000e+00> : vector<8x8xf32>
    %10 = tpu.matmul %7, %7, %cst {dimension_numbers = #tpu.dot_dimension_numbers<[1], [1], [0], [0], [0, 0, 1, 0], [], []>} : vector<8x144xf32>, vector<8x144xf32>, vector<8x8xf32> -> vector<8x8xf32>
    %11 = arith.addf %9, %10 : vector<8x8xf32>
    %c0_11 = arith.constant 0 : index
    %c0_12 = arith.constant 0 : index
    %c0_13 = arith.constant 0 : index
    %12 = vector.load %arg6[%c0_11, %c0_12, %c0_13] : memref<1x8x8xf32, #tpu.memory_space<vmem>>, vector<1x8x8xf32>
    %13 = vector.shape_cast %12 : vector<1x8x8xf32> to vector<8x8xf32>
    %14 = vector.shape_cast %11 : vector<8x8xf32> to vector<1x8x8xf32>
    tpu.vector_store %arg6[%c0_11, %c0_12, %c0_13], %14 {strides = array<i32>} : memref<1x8x8xf32, #tpu.memory_space<vmem>>, vector<1x8x8xf32>,
    return
  }
  func.func @transform_0(%arg0: i32, %arg1: i32) -> (i32, i32) {
    %c1_i32 = arith.constant 1 : i32
    %0 = arith.muli %arg0, %c1_i32 : i32
    %1 = arith.addi %0, %arg1 : i32
    %c0_i32 = arith.constant 0 : i32
    %c0_i32_0 = arith.constant 0 : i32
    return %c0_i32, %1 : i32, i32
  }
  func.func @transform_1(%arg0: i32, %arg1: i32) -> (i32, i32) {
    %c1_i32 = arith.constant 1 : i32
    %0 = arith.muli %arg0, %c1_i32 : i32
    %1 = arith.addi %0, %arg1 : i32
    %c0_i32 = arith.constant 0 : i32
    %c0_i32_0 = arith.constant 0 : i32
    return %c0_i32, %1 : i32, i32
  }
  func.func @transform_2(%arg0: i32, %arg1: i32) -> (i32, i32) {
    %c1_i32 = arith.constant 1 : i32
    %0 = arith.muli %arg0, %c1_i32 : i32
    %1 = arith.addi %0, %arg1 : i32
    %c0_i32 = arith.constant 0 : i32
    %c0_i32_0 = arith.constant 0 : i32
    return %c0_i32, %1 : i32, i32
  }
  func.func @transform_3(%arg0: i32, %arg1: i32) -> (i32, i32) {
    %c1_i32 = arith.constant 1 : i32
    %0 = arith.muli %arg0, %c1_i32 : i32
    %1 = arith.addi %0, %arg1 : i32
    %c0_i32 = arith.constant 0 : i32
    %c0_i32_0 = arith.constant 0 : i32
    return %c0_i32, %1 : i32, i32
  }
  func.func @transform_4(%arg0: i32, %arg1: i32) -> (i32, i32, i32) {
    %c0_i32 = arith.constant 0 : i32
    %c0_i32_0 = arith.constant 0 : i32
    %c0_i32_1 = arith.constant 0 : i32
    return %arg0, %c0_i32, %c0_i32_0 : i32, i32, i32
  }
}

</mosaic_0001>

<llo_original>
// kernel: tpu_custom_call.1
$region0: #{tpu_custom_call.1}
  #allocation0 [shape = 'u32[]', space=smem, size = 0x4, offset = 0x4, fixed_abs, tag = 'smem constant byte address 0x4 - core index']
  #allocation1 [shape = 'u32[72,128]{1,0:T(1,128)}', space=vmem, size = 0x9000, scoped, tag = 'internal scratch']
  %s0 = inlined_call_operand.hbm [shape: f32[2,144], index: 0, kind: input, shape index: {}]
  %s1 = inlined_call_operand.hbm [shape: f32[2,144], index: 1, kind: input, shape index: {}]
  %s2 = inlined_call_operand.hbm [shape: f32[2,144], index: 2, kind: input, shape index: {}]
  %s3 = inlined_call_operand.hbm [shape: f32[2,144], index: 3, kind: input, shape index: {}]
  %s4 = inlined_call_operand.hbm [shape: f32[1,8,8], index: 4, kind: output, shape index: {}]
  %s5 = sld [smem:[#allocation0]]
  $region46: #{tpu_custom_call.1} parent=0
    _
  %s7 = ssub.s32 1, %s5
  %s8 = scalar_select 0, %s7, %s5
  $region1: #{tpu_custom_call.1} parent=0
    #allocation2 [shape = 'u8[2048]{0}', space=vmem, size = 0x800, scoped, tag = 'input window, operand 0, single buffered']
    #allocation3 [shape = 's32[1]{0}', space=sflag, size = 0x4, scoped, tag = 'scoped memory for tpu_custom_call.1']
    #allocation4 [shape = 's32[1]{0}', space=sflag, size = 0x4, scoped, tag = 'scoped memory for tpu_custom_call.1']
    #allocation5 [shape = 'u8[2048]{0}', space=vmem, size = 0x800, scoped, tag = 'input window, operand 1, single buffered']
    #allocation6 [shape = 's32[1]{0}', space=sflag, size = 0x4, scoped, tag = 'scoped memory for tpu_custom_call.1']
    #allocation7 [shape = 'u8[2048]{0}', space=vmem, size = 0x800, scoped, tag = 'input window, operand 2, single buffered']
    #allocation8 [shape = 'u8[2048]{0}', space=vmem, size = 0x800, scoped, tag = 'input window, operand 3, single buffered']
    #allocation9 [shape = 's32[1]{0}', space=sflag, size = 0x4, scoped, tag = 'scoped memory for tpu_custom_call.1']
    #allocation10 [shape = 'u8[4096]{0}', space=vmem, size = 0x1000, scoped, tag = 'output window, operand 0, single buffered']
    %9 = vsyncpa [#allocation3], 0
    %10 = vsyncpa [#allocation6], 0
    %11 = vsyncpa [#allocation9], 0
    %12 = vsyncpa [#allocation4], 0
    // Predicated region
    $region2: #{tpu_custom_call.1} parent=1 // pred_check
      _
    $region3: #{tpu_custom_call.1} parent=1 // pred_check_branch
      %14 = sbr.rel (0) target = $region5
    $region4: #{tpu_custom_call.1} parent=1 // pred_region
      %s15 = sadd.s32 0, 0
      %s16 = smul.u32 2, %s15
      %18 = vsyncadd [#allocation3], 0
      %s19 = smul.addr %s16, 2
      %s20 = scalar_lea.hbm %s0, %s19
      %s22 = sshll.u32 %s20, 4
      %s23 = int_to_ptr.hbm [resolvable:$true] %s22
      %s24 = sshll.u32 [#allocation2], 4
      %s25 = int_to_ptr.vmem [resolvable:$true] %s24
      %27 = dma.hbm_to_vmem [thread:$0]  %s23, 64, %s25, [#allocation3]
    $region5: #{tpu_custom_call.1} parent=1 // pred_fallthru
      _
    // Predicated region
    $region6: #{tpu_custom_call.1} parent=1 // pred_check
      _
    $region7: #{tpu_custom_call.1} parent=1 // pred_check_branch
      %29 = sbr.rel (0) target = $region9
    $region8: #{tpu_custom_call.1} parent=1 // pred_region
      %s30 = sadd.s32 0, 0
      %s31 = smul.u32 2, %s30
      %33 = vsyncadd [#allocation6], 0
      %s34 = smul.addr %s31, 2
      %s35 = scalar_lea.hbm %s1, %s34
      %s37 = sshll.u32 %s35, 4
      %s38 = int_to_ptr.hbm [resolvable:$true] %s37
      %s39 = sshll.u32 [#allocation5], 4
      %s40 = int_to_ptr.vmem [resolvable:$true] %s39
      %42 = dma.hbm_to_vmem [thread:$0]  %s38, 64, %s40, [#allocation6]
    $region9: #{tpu_custom_call.1} parent=1 // pred_fallthru
      _
    // Predicated region
    $region10: #{tpu_custom_call.1} parent=1 // pred_check
      _
    $region11: #{tpu_custom_call.1} parent=1 // pred_check_branch
      %44 = sbr.rel (0) target = $region13
    $region12: #{tpu_custom_call.1} parent=1 // pred_region
      %s45 = sadd.s32 0, 0
      %s46 = smul.u32 2, %s45
      %48 = vsyncadd [#allocation6], 0
      %s49 = smul.addr %s46, 2
      %s50 = scalar_lea.hbm %s2, %s49
      %s52 = sshll.u32 %s50, 4
      %s53 = int_to_ptr.hbm [resolvable:$true] %s52
      %s54 = sshll.u32 [#allocation7], 4
      %s55 = int_to_ptr.vmem [resolvable:$true] %s54
      %57 = dma.hbm_to_vmem [thread:$0]  %s53, 64, %s55, [#allocation6]
    $region13: #{tpu_custom_call.1} parent=1 // pred_fallthru
      _
    // Predicated region
    $region14: #{tpu_custom_call.1} parent=1 // pred_check
      _
    $region15: #{tpu_custom_call.1} parent=1 // pred_check_branch
      %59 = sbr.rel (0) target = $region17
    $region16: #{tpu_custom_call.1} parent=1 // pred_region
      %s60 = sadd.s32 0, 0
      %s61 = smul.u32 2, %s60
      %63 = vsyncadd [#allocation9], 0
      %s64 = smul.addr %s61, 2
      %s65 = scalar_lea.hbm %s3, %s64
      %s67 = sshll.u32 %s65, 4
      %s68 = int_to_ptr.hbm [resolvable:$true] %s67
      %s69 = sshll.u32 [#allocation8], 4
      %s70 = int_to_ptr.vmem [resolvable:$true] %s69
      %72 = dma.hbm_to_vmem [thread:$0]  %s68, 64, %s70, [#allocation9]
    $region17: #{tpu_custom_call.1} parent=1 // pred_fallthru
      _
    // Predicated region
    $region18: #{tpu_custom_call.1} parent=1 // pred_check
      _
    $region19: #{tpu_custom_call.1} parent=1 // pred_check_branch
      %74 = sbr.rel (0) target = $region21
    $region20: #{tpu_custom_call.1} parent=1 // pred_region
      %76 = dma.done [#allocation3], 64
    $region21: #{tpu_custom_call.1} parent=1 // pred_fallthru
      _
    // Predicated region
    $region22: #{tpu_custom_call.1} parent=1 // pred_check
      _
    $region23: #{tpu_custom_call.1} parent=1 // pred_check_branch
      %78 = sbr.rel (0) target = $region25
    $region24: #{tpu_custom_call.1} parent=1 // pred_region
      %80 = dma.done [#allocation6], 64
    $region25: #{tpu_custom_call.1} parent=1 // pred_fallthru
      _
    // Predicated region
    $region26: #{tpu_custom_call.1} parent=1 // pred_check
      _
    $region27: #{tpu_custom_call.1} parent=1 // pred_check_branch
      %82 = sbr.rel (0) target = $region29
    $region28: #{tpu_custom_call.1} parent=1 // pred_region
      %84 = dma.done [#allocation6], 64
    $region29: #{tpu_custom_call.1} parent=1 // pred_fallthru
      _
    // Predicated region
    $region30: #{tpu_custom_call.1} parent=1 // pred_check
      _
    $region31: #{tpu_custom_call.1} parent=1 // pred_check_branch
      %86 = sbr.rel (0) target = $region33
    $region32: #{tpu_custom_call.1} parent=1 // pred_region
      %88 = dma.done [#allocation9], 64
    $region33: #{tpu_custom_call.1} parent=1 // pred_fallthru
      _
    %s89 = sadd.s32 0, 0
    %s90 = smul.u32 2, %s89
    %s91 = sadd.s32 0, 0
    %s92 = smul.u32 2, %s91
    %s93 = sadd.s32 0, 0
    %s94 = smul.u32 2, %s93
    %s95 = sadd.s32 0, 0
    %s96 = smul.u32 2, %s95
    %p97 = scmp.eq.s32.totalorder 0, 0
    // Predicated region
    $region34: #{tpu_custom_call.1} parent=1 // pred_check
      %p98 = pneg %p97
    $region35: #{tpu_custom_call.1} parent=1 // pred_check_branch
      %100 = sbr.rel (%p98) target = $region37
    $region36: #{tpu_custom_call.1} parent=1 // pred_region
      %vm101 = vcmask 64512
      %102 = vst.msk [vmem:[#allocation10] sm:$0xff] %vm101, 0.0
    $region37: #{tpu_custom_call.1} parent=1 // pred_fallthru
      _
    %v103 = vld [vmem:[#allocation2] sm:$0xf]
    %v104 = vld [vmem:[#allocation5] sm:$0xf]
    %v105 = vld [vmem:[#allocation7] sm:$0xf]
    %v106 = vld [vmem:[#allocation8] sm:$0xf]
    %108 = vst [vmem:[#allocation1] ss:$4 sm:$0xff] %v103
    %v109 = vld.sshfl [vmem:[#allocation1] sm:$0xff pattern:$0x73625140]
    %v110 = vld.sshfl [vmem:[#allocation1 + $0x8] sm:$0xff pattern:$0x73625140]
    %s114 = scalar_lea.vmem [#allocation1], 1
    %115 = vst [vmem:[%s114] ss:$4 sm:$0xff] %v104
    %v116 = vld.sshfl [vmem:[#allocation1] sm:$0xff pattern:$0x73625140]
    %v117 = vld.sshfl [vmem:[#allocation1 + $0x8] sm:$0xff pattern:$0x73625140]
    %s121 = scalar_lea.vmem [#allocation1], 2
    %122 = vst [vmem:[%s121] ss:$4 sm:$0xff] %v105
    %v123 = vld.sshfl [vmem:[#allocation1] sm:$0xff pattern:$0x73625140]
    %v124 = vld.sshfl [vmem:[#allocation1 + $0x8] sm:$0xff pattern:$0x73625140]
    %s128 = scalar_lea.vmem [#allocation1], 3
    %129 = vst [vmem:[%s128] ss:$4 sm:$0xff] %v106
    %v130 = vld.sshfl [vmem:[#allocation1] sm:$0xff pattern:$0x73625140]
    %v131 = vld.sshfl [vmem:[#allocation1 + $0x8] sm:$0xff pattern:$0x73625140]
    %vm134 = vcmask 1041408
    %v135 = vsel %vm134, %v109, %v116
    %v136 = vsel %vm134, %v110, %v117
    %vm137 = vcmask 1043456
    %v138 = vsel %vm137, %v135, %v123
    %v139 = vsel %vm137, %v136, %v124
    %vm140 = vcmask 1045504
    %v141 = vsel %vm140, %v138, %v130
    %v142 = vsel %vm140, %v139, %v131
    %v143 = vld [vmem:[#allocation10] sm:$0xff]
    %vm144 = vcmask 130048
    %v146 = vsel %vm144, %v142, 0
    %148 = vmatpush.xpose.msra.mxu0 0.0
    %149 = vmatpush.xpose.msra.mxu0 0.0
    %150 = vmatpush.xpose.msra.mxu0 0.0
    %151 = vmatpush.xpose.msra.mxu0 0.0
    %152 = vmatpush.xpose.msra.mxu0 0.0
    %153 = vmatpush.xpose.msra.mxu0 0.0
    %154 = vmatpush.xpose.msra.mxu0 0.0
    %155 = vmatpush.xpose.msra.mxu0 0.0
    %156 = vmatpush.xpose.msra.mxu0 0.0
    %157 = vmatpush.xpose.msra.mxu0 0.0
    %158 = vmatpush.xpose.msra.mxu0 0.0
    %159 = vmatpush.xpose.msra.mxu0 0.0
    %160 = vmatpush.xpose.msra.mxu0 0.0
    %161 = vmatpush.xpose.msra.mxu0 0.0
    %162 = vmatpush.xpose.msra.mxu0 0.0
    %163 = vmatpush.xpose.msra.mxu0 %v141
    %164 = vmatmul.f32.gmra.mxu0 %v141
    %v165 = vpop.f32.mrf.mxu0
    %v166 = vadd.f32 0.0, %v165
    %167 = vdwg.mxu0
    %168 = vmatpush.xpose.msra.mxu0 0.0
    %169 = vmatpush.xpose.msra.mxu0 0.0
    %170 = vmatpush.xpose.msra.mxu0 0.0
    %171 = vmatpush.xpose.msra.mxu0 0.0
    %172 = vmatpush.xpose.msra.mxu0 0.0
    %173 = vmatpush.xpose.msra.mxu0 0.0
    %174 = vmatpush.xpose.msra.mxu0 0.0
    %175 = vmatpush.xpose.msra.mxu0 0.0
    %176 = vmatpush.xpose.msra.mxu0 0.0
    %177 = vmatpush.xpose.msra.mxu0 0.0
    %178 = vmatpush.xpose.msra.mxu0 0.0
    %179 = vmatpush.xpose.msra.mxu0 0.0
    %180 = vmatpush.xpose.msra.mxu0 0.0
    %181 = vmatpush.xpose.msra.mxu0 0.0
    %182 = vmatpush.xpose.msra.mxu0 0.0
    %183 = vmatpush.xpose.msra.mxu0 %v146
    %184 = vmatmul.f32.gmra.mxu0 %v146
    %v185 = vpop.f32.mrf.mxu0
    %v186 = vadd.f32 %v166, %v185
    %187 = vdwg.mxu0
    %v188 = vadd.f32 %v143, %v186
    %vm189 = vcmask 64512
    %190 = vst.msk [vmem:[#allocation10] sm:$0xff] %vm189, %v188
    // Predicated region
    $region38: #{tpu_custom_call.1} parent=1 // pred_check
      _
    $region39: #{tpu_custom_call.1} parent=1 // pred_check_branch
      %192 = sbr.rel (0) target = $region41
    $region40: #{tpu_custom_call.1} parent=1 // pred_region
      %194 = vsyncadd [#allocation4], 0
      %s196 = sshll.u32 [#allocation10], 4
      %s197 = int_to_ptr.vmem [resolvable:$true] %s196
      %s198 = sshll.u32 %s4, 4
      %s199 = int_to_ptr.hbm [resolvable:$true] %s198
      %201 = dma.vmem_to_hbm [thread:$0]  %s197, 128, %s199, [#allocation4]
    $region41: #{tpu_custom_call.1} parent=1 // pred_fallthru
      _
    // Predicated region
    $region42: #{tpu_custom_call.1} parent=1 // pred_check
      _
    $region43: #{tpu_custom_call.1} parent=1 // pred_check_branch
      %203 = sbr.rel (0) target = $region45
    $region44: #{tpu_custom_call.1} parent=1 // pred_region
      %205 = dma.done [#allocation4], 128
    $region45: #{tpu_custom_call.1} parent=1 // pred_fallthru
      _
    %206 = vsyncpa [#allocation3], 1
    %207 = vsyncpa [#allocation6], 1
    %208 = vsyncpa [#allocation9], 1
    %209 = vsyncpa [#allocation4], 1

</llo_original>
